<compile_context>
chip_gen: v5e
topology: v5e:2x2
jax: 0.10.0
libtpu: 0.0.40
codegen_flags: <defaults>
</compile_context>

<pallas_src>
import jax
import jax.numpy as jnp
from jax.experimental import pallas as pl
from jax.experimental.pallas import tpu as pltpu


# --------------------------------------------------------------------------
# Kernels (all row-tiled over A: one grid step handles TM graph nodes)
# --------------------------------------------------------------------------

def _prep_kernel(a_ref, x_ref, w1_ref, dinv_ref, u_ref):
    """dinv_i = (sum_j A[i,j] + 1)^-1/2 ;  u = dinv * (x @ W1)   (row-local)."""
    a = a_ref[...]                                          # (TM, N) f32
    d = jnp.sum(a, axis=-1, keepdims=True) + 1.0            # rowsum(A + I)
    dinv = jax.lax.rsqrt(d)                                 # (TM, 1) f32
    dinv_ref[...] = dinv
    # reassociated fc1: compute x @ W1 first (bias added after A_hat later)
    z = jnp.dot(x_ref[...].astype(jnp.bfloat16), w1_ref[...],
                preferred_element_type=jnp.float32)         # (TM, H) f32
    u_ref[...] = (dinv * z).astype(jnp.bfloat16)


def _agg1_kernel(a_ref, u_all_ref, u_tile_ref, dinv_ref, b1_ref, w2_ref,
                 w_ref):
    """h = relu(A_hat @ (x W1) + b1);  w = dinv * (h @ W2)   (per row tile)."""
    a_bf = a_ref[...].astype(jnp.bfloat16)                  # (TM, N)
    # (A_hat @ z)_tile = dinv_tile * (A_tile @ u + u_tile),  u = dinv * z
    acc = jnp.dot(a_bf, u_all_ref[...],
                  preferred_element_type=jnp.float32)       # (TM, H) f32
    acc = acc + u_tile_ref[...].astype(jnp.float32)         # +I term
    h = dinv_ref[...] * acc + b1_ref[...]
    h = jnp.maximum(h, 0.0)                                 # ReLU (dropout=id)
    # reassociated fc2: pre-multiply by W2 now, bias after second A_hat
    w = jnp.dot(h.astype(jnp.bfloat16), w2_ref[...],
                preferred_element_type=jnp.float32)         # (TM, O) f32
    w_ref[...] = (dinv_ref[...] * w).astype(jnp.bfloat16)


def _agg2_kernel(a_ref, w_all_ref, w_tile_ref, dinv_ref, b2_ref, o_ref):
    """out = A_hat @ (h W2) + b2   (per row tile)."""
    a_bf = a_ref[...].astype(jnp.bfloat16)                  # (TM, N)
    acc = jnp.dot(a_bf, w_all_ref[...],
                  preferred_element_type=jnp.float32)       # (TM, O) f32
    acc = acc + w_tile_ref[...].astype(jnp.float32)         # +I term
    o_ref[...] = dinv_ref[...] * acc + b2_ref[...]


# --------------------------------------------------------------------------
# Wrapper
# --------------------------------------------------------------------------

def _pick_tm(n):
    """Largest row tile keeping a double-buffered (tm, n) f32 A tile ~<=24 MiB
    (safe under v7x's 64 MiB VMEM / 32 MiB default scoped limit)."""
    budget = 12 * 1024 * 1024
    for tm in (1024, 512, 256, 128, 64, 32, 16, 8):
        if n % tm == 0 and tm * n * 4 <= budget:
            return tm
    return n


def gcn_forward(A, x, w1, b1, w2, b2, *, tm=None):
    N = A.shape[0]
    in_dim = x.shape[1]
    hidden = w1.shape[1]
    out_dim = w2.shape[1]
    H = pl.cdiv(hidden, 128) * 128      # lane-dense hidden width
    O = pl.cdiv(out_dim, 128) * 128     # lane-dense output width

    if tm is None:
        tm = _pick_tm(N)
    assert N % tm == 0, "N must be a multiple of the row-tile size"
    grid = (N // tm,)

    A = A.astype(jnp.float32)
    x = x.astype(jnp.float32)
    # Zero-pad weights/biases to 128-wide lanes; weights cast once to bf16.
    w1p = jnp.pad(w1, ((0, 0), (0, H - hidden))).astype(jnp.bfloat16)
    b1p = jnp.pad(b1.reshape(1, -1), ((0, 0), (0, H - hidden))).astype(jnp.float32)
    w2p = jnp.pad(w2, ((0, H - hidden), (0, O - out_dim))).astype(jnp.bfloat16)
    b2p = jnp.pad(b2.reshape(1, -1), ((0, 0), (0, O - out_dim))).astype(jnp.float32)

    cp = pltpu.CompilerParams(
        dimension_semantics=("parallel",),       # row tiles shard across TCs
        vmem_limit_bytes=40 * 1024 * 1024,
    )

    row_map = lambda i: (i, 0)
    const_map = lambda i: (0, 0)

    # ---- pass 1: per-row degrees + u = D^-1/2 (x @ W1) --------------------
    dinv, u = pl.pallas_call(
        _prep_kernel,
        grid=grid,
        in_specs=[
            pl.BlockSpec((tm, N), row_map),          # A row tile (f32)
            pl.BlockSpec((tm, in_dim), row_map),     # x row tile
            pl.BlockSpec((in_dim, H), const_map),    # W1 (resident)
        ],
        out_specs=(
            pl.BlockSpec((tm, 1), row_map),          # dinv
            pl.BlockSpec((tm, H), row_map),          # u (bf16, lane-dense)
        ),
        out_shape=(
            jax.ShapeDtypeStruct((N, 1), jnp.float32),
            jax.ShapeDtypeStruct((N, H), jnp.bfloat16),
        ),
        compiler_params=cp,
        cost_estimate=pl.CostEstimate(
            flops=N * N + 2 * N * in_dim * H + 2 * N * H,
            transcendentals=N,
            bytes_accessed=4 * N * N + 4 * N * in_dim + 2 * in_dim * H
                           + 4 * N + 2 * N * H),
    )(A, x, w1p)

    # ---- pass 2: h = relu(A_hat (xW1) + b1);  w = D^-1/2 (h @ W2) ----------
    w = pl.pallas_call(
        _agg1_kernel,
        grid=grid,
        in_specs=[
            pl.BlockSpec((tm, N), row_map),          # A row tile
            pl.BlockSpec((N, H), const_map),         # u, full (resident)
            pl.BlockSpec((tm, H), row_map),          # u, this row tile (+I)
            pl.BlockSpec((tm, 1), row_map),          # dinv tile
            pl.BlockSpec((1, H), const_map),         # b1
            pl.BlockSpec((H, O), const_map),         # W2
        ],
        out_specs=pl.BlockSpec((tm, O), row_map),
        out_shape=jax.ShapeDtypeStruct((N, O), jnp.bfloat16),
        compiler_params=cp,
        cost_estimate=pl.CostEstimate(
            flops=2 * N * N * H + 2 * N * H * O + 5 * N * H,
            transcendentals=0,
            bytes_accessed=4 * N * N + 4 * N * H + 4 * N + 4 * H
                           + 2 * H * O + 2 * N * O),
    )(A, u, u, dinv, b1p, w2p)

    # ---- pass 3: out = A_hat (h W2) + b2 -----------------------------------
    out_p = pl.pallas_call(
        _agg2_kernel,
        grid=grid,
        in_specs=[
            pl.BlockSpec((tm, N), row_map),          # A row tile
            pl.BlockSpec((N, O), const_map),         # w, full (resident)
            pl.BlockSpec((tm, O), row_map),          # w, this row tile (+I)
            pl.BlockSpec((tm, 1), row_map),          # dinv tile
            pl.BlockSpec((1, O), const_map),         # b2
        ],
        out_specs=pl.BlockSpec((tm, O), row_map),    # lane-dense f32 output
        out_shape=jax.ShapeDtypeStruct((N, O), jnp.float32),
        compiler_params=cp,
        cost_estimate=pl.CostEstimate(
            flops=2 * N * N * O + 3 * N * O,
            transcendentals=0,
            bytes_accessed=4 * N * N + 4 * N * O + 4 * N + 4 * O + 4 * N * O),
    )(A, w, w, dinv, b2p)

    return out_p[:, :out_dim]


# --------------------------------------------------------------------------
# Reference (pure JAX, f32) — mirrors the PyTorch module in eval mode
# --------------------------------------------------------------------------

def _gcn_reference(A, x, w1, b1, w2, b2):
    n = A.shape[0]
    a_aug = A + jnp.eye(n, dtype=A.dtype)
    d = jnp.sum(a_aug, axis=-1)
    dm = jnp.diag(d ** -0.5)
    a_hat = dm @ a_aug @ dm
    h = jnp.maximum(a_hat @ x @ w1 + b1, 0.0)
    return a_hat @ h @ w2 + b2


if __name__ == "__main__":
    # Small deterministic shapes consistent with the module.
    N = 256                 # number of graph nodes
    in_dim = 32
    hidden = in_dim // 2    # 16
    out_dim = 8

    key = jax.random.PRNGKey(0)
    k_a, k_x, k_w1, k_b1, k_w2, k_b2 = jax.random.split(key, 6)

    # Non-negative adjacency -> augmented degrees >= 1, rsqrt well defined.
    A = jax.random.uniform(k_a, (N, N), dtype=jnp.float32)
    x = jax.random.normal(k_x, (N, in_dim), dtype=jnp.float32)

    w1 = jax.random.normal(k_w1, (in_dim, hidden), dtype=jnp.float32) * 0.1
    b1 = jax.random.normal(k_b1, (1, hidden), dtype=jnp.float32) * 0.1
    w2 = jax.random.normal(k_w2, (hidden, out_dim), dtype=jnp.float32) * 0.1
    b2 = jax.random.normal(k_b2, (1, out_dim), dtype=jnp.float32) * 0.1

    # tm=128 -> 2-step grid so the tiling / pipelining path is exercised.
    out = gcn_forward(A, x, w1, b1, w2, b2, tm=128)
    jax.block_until_ready(out)

    assert out.shape == (N, out_dim)

    # Correctness vs f32 reference (bf16 MXU path -> loose tolerance).
    ref = _gcn_reference(A, x, w1, b1, w2, b2)
    max_err = float(jnp.max(jnp.abs(out - ref)))
    assert max_err < 3e-2, f"max abs error vs reference: {max_err}"

    print("KERNEL_OK")
</pallas_src>

<mosaic_0001>
module attributes {stable_mosaic.version = 11 : i64} {
  func.func @_prep_kernel(%arg0: i32, %arg1: memref<128x256xf32, #tpu.memory_space<vmem>>, %arg2: memref<128x32xf32, #tpu.memory_space<vmem>>, %arg3: memref<32x128xbf16, #tpu.memory_space<vmem>>, %arg4: memref<128x1xf32, #tpu.memory_space<vmem>>, %arg5: memref<128x128xbf16, #tpu.memory_space<vmem>>) attributes {dimension_semantics = [#tpu.dimension_semantics<parallel>], iteration_bounds = array<i64: 2>, scalar_prefetch = 0 : i64, scratch_operands = 0 : i64, tpu.core_type = #tpu.core_type<tc>, window_params = [{transform_indices = @transform_0, window_bounds = array<i64: 128, 256>}, {transform_indices = @transform_1, window_bounds = array<i64: 128, 32>}, {pipeline_mode = #tpu.pipeline_mode<synchronous>, transform_indices = @transform_2, window_bounds = array<i64: 32, 128>}, {transform_indices = @transform_3, window_bounds = array<i64: 128, 1>}, {transform_indices = @transform_4, window_bounds = array<i64: 128, 128>}]} {
    %c0 = arith.constant 0 : index
    %c0_0 = arith.constant 0 : index
    %0 = vector.load %arg1[%c0, %c0_0] : memref<128x256xf32, #tpu.memory_space<vmem>>, vector<128x256xf32>
    %cst = arith.constant dense<0.000000e+00> : vector<128xf32>
    %1 = vector.multi_reduction <add>, %0, %cst [1] : vector<128x256xf32> to vector<128xf32>
    %2 = vector.shape_cast %1 : vector<128xf32> to vector<128x1xf32>
    %cst_1 = arith.constant 1.000000e+00 : f32
    %3 = vector.broadcast %cst_1 : f32 to vector<128x1xf32>
    %4 = arith.addf %2, %3 : vector<128x1xf32>
    %5 = math.rsqrt %4 : vector<128x1xf32>
    %c0_2 = arith.constant 0 : index
    %c0_3 = arith.constant 0 : index
    %6 = vector.load %arg4[%c0_2, %c0_3] : memref<128x1xf32, #tpu.memory_space<vmem>>, vector<128x1xf32>
    tpu.vector_store %arg4[%c0_2, %c0_3], %5 {strides = array<i32>} : memref<128x1xf32, #tpu.memory_space<vmem>>, vector<128x1xf32>,
    %c0_4 = arith.constant 0 : index
    %c0_5 = arith.constant 0 : index
    %7 = vector.load %arg2[%c0_4, %c0_5] : memref<128x32xf32, #tpu.memory_space<vmem>>, vector<128x32xf32>
    %8 = arith.truncf %7 : vector<128x32xf32> to vector<128x32xbf16>
    %c0_6 = arith.constant 0 : index
    %c0_7 = arith.constant 0 : index
    %9 = vector.load %arg3[%c0_6, %c0_7] : memref<32x128xbf16, #tpu.memory_space<vmem>>, vector<32x128xbf16>
    %cst_8 = arith.constant dense<0.000000e+00> : vector<128x128xf32>
    %10 = tpu.matmul %8, %9, %cst_8 {dimension_numbers = #tpu.dot_dimension_numbers<[1], [0], [0], [1], [0, 0, 1, 1], [], []>} : vector<128x32xbf16>, vector<32x128xbf16>, vector<128x128xf32> -> vector<128x128xf32>
    %11 = vector.broadcast %5 : vector<128x1xf32> to vector<128x128xf32>
    %12 = arith.mulf %11, %10 : vector<128x128xf32>
    %13 = arith.truncf %12 : vector<128x128xf32> to vector<128x128xbf16>
    %c0_9 = arith.constant 0 : index
    %c0_10 = arith.constant 0 : index
    %14 = vector.load %arg5[%c0_9, %c0_10] : memref<128x128xbf16, #tpu.memory_space<vmem>>, vector<128x128xbf16>
    tpu.vector_store %arg5[%c0_9, %c0_10], %13 {strides = array<i32>} : memref<128x128xbf16, #tpu.memory_space<vmem>>, vector<128x128xbf16>,
    return
  }
  func.func @transform_0(%arg0: i32) -> (i32, i32) {
    %c0_i32 = arith.constant 0 : i32
    %c0_i32_0 = arith.constant 0 : i32
    return %arg0, %c0_i32 : i32, i32
  }
  func.func @transform_1(%arg0: i32) -> (i32, i32) {
    %c0_i32 = arith.constant 0 : i32
    %c0_i32_0 = arith.constant 0 : i32
    return %arg0, %c0_i32 : i32, i32
  }
  func.func @transform_2(%arg0: i32) -> (i32, i32) {
    %c0_i32 = arith.constant 0 : i32
    %c0_i32_0 = arith.constant 0 : i32
    %c0_i32_1 = arith.constant 0 : i32
    return %c0_i32, %c0_i32_0 : i32, i32
  }
  func.func @transform_3(%arg0: i32) -> (i32, i32) {
    %c0_i32 = arith.constant 0 : i32
    %c0_i32_0 = arith.constant 0 : i32
    return %arg0, %c0_i32 : i32, i32
  }
  func.func @transform_4(%arg0: i32) -> (i32, i32) {
    %c0_i32 = arith.constant 0 : i32
    %c0_i32_0 = arith.constant 0 : i32
    return %arg0, %c0_i32 : i32, i32
  }
}

</mosaic_0001>

<llo_original>
// kernel: tpu_custom_call.1
$region0: #{tpu_custom_call.1}
  #allocation0 [shape = 'u32[]', space=smem, size = 0x4, offset = 0x4, fixed_abs, tag = 'smem constant byte address 0x4 - core index']
  #allocation1 [shape = 'u32[72,128]{1,0:T(1,128)}', space=vmem, size = 0x9000, scoped, tag = 'internal scratch']
  %s0 = inlined_call_operand.hbm [shape: f32[256,256], index: 0, kind: input, shape index: {}]
  %s1 = inlined_call_operand.vmem [shape: f32[256,32], index: 1, kind: input, shape index: {}]
  %s2 = inlined_call_operand.vmem [shape: bf16[32,128], index: 2, kind: input, shape index: {}]
  %s3 = inlined_call_operand.vmem [shape: f32[256,1], index: 3, kind: output, shape index: {0}]
  %s4 = inlined_call_operand.hbm [shape: bf16[256,128], index: 4, kind: output, shape index: {1}]
  %5 = xla_tuple %s3, %s4
  %s6 = sld [smem:[#allocation0]]
  $region57: #{tpu_custom_call.1} parent=0
    _
  %s8 = ssub.s32 1, %s6
  %s9 = scalar_select 0, %s8, %s6
  $region1: #{tpu_custom_call.1} parent=0
    #allocation2 [shape = 'u8[262144]{0}', space=vmem, size = 0x40000, scoped, tag = 'input window, operand 0']
    #allocation3 [shape = 's32[2]{0}', space=sflag, size = 0x8, scoped, tag = 'scoped memory for tpu_custom_call.1']
    #allocation4 [shape = 's32[2]{0}', space=sflag, size = 0x8, scoped, tag = 'scoped memory for tpu_custom_call.1']
    #allocation5 [shape = 'u8[65536]{0}', space=vmem, size = 0x10000, scoped, tag = 'output window, operand 1']
    %10 = vsyncpa [#allocation3], 0
    %s11 = scalar_lea.sflag [#allocation3], 1
    %12 = vsyncpa %s11, 0
    %13 = vsyncpa [#allocation4], 0
    %s14 = scalar_lea.sflag [#allocation4], 1
    %15 = vsyncpa %s14, 0
    loop: start=0, step=1, limit=4
    $region2: #{tpu_custom_call.1} parent=1 // loop_pre_header
      _
    $region3: #{tpu_custom_call.1} parent=1 // loop_header
      %s17 = sphi 0, %s21
      %p18 = scmp.ge.s32.totalorder %s17, 4
      %s27 = sphi 0, %s29
      %s30 = sphi 0, %s27
      %s31 = sphi 0, %s30
      %s47 = sphi 0, %s31
      %s53 = sphi 0, %s55
      %s56 = sphi 0, %s53
      %s57 = sphi 0, %s56
      %s73 = sphi 0, %s57
      %s77 = sphi 0, %s77
      %s79 = sphi 0, %s77
      %s80 = sphi 0, %s79
      %s94 = sphi 0, %s80
      %s100 = sphi 0, %s102
      %s103 = sphi 0, %s100
      %s104 = sphi 0, %s103
      %s120 = sphi 0, %s104
      %s126 = sphi 0, %s128
      %s129 = sphi 0, %s126
      %s130 = sphi 0, %s129
      %s146 = sphi 0, %s130
    $region4: #{tpu_custom_call.1} parent=1 // loop_header_branch
      %20 = sbr.rel (%p18) target = $region8
    $region5: #{tpu_custom_call.1} parent=1 // loop_body
      %s22 = ssub.s32 %s17, 1
      %s23 = ssub.s32 %s17, 2
      %s24 = sadd.s32 %s17, 1
      %s25 = ssub.s32 %s17, %s24
      %p26 = scmp.eq.s32.totalorder %s25, 0
      %s28 = sadd.s32 %s27, 1
      %s29 = scalar_select %p26, %s27, %s28
      %p32 = pneg %p26
      %p33 = scmp.eq.s32.totalorder %s17, 1
      %p34 = por %p32, %p33
      %p35 = scmp.ne.s32.totalorder %s27, %s30
      %p36 = scmp.eq.s32.totalorder %s17, 0
      %p37 = por %p35, %p36
      %p38 = scmp.ne.s32.totalorder %s27, %s30
      %p39 = scmp.eq.s32.totalorder %s22, 1
      %p40 = por %p38, %p39
      %p41 = scmp.ne.s32.totalorder %s30, %s31
      %p42 = scmp.eq.s32.totalorder %s22, 0
      %p43 = por %p41, %p42
      %p44 = scmp.ne.s32.totalorder %s30, %s31
      %p45 = scmp.eq.s32.totalorder %s23, 1
      %p46 = por %p44, %p45
      %p48 = scmp.ne.s32.totalorder %s31, %s47
      %p49 = scmp.eq.s32.totalorder %s23, 0
      %p50 = por %p48, %p49
      %s51 = ssub.s32 %s17, %s24
      %p52 = scmp.eq.s32.totalorder %s51, 0
      %s54 = sadd.s32 %s53, 1
      %s55 = scalar_select %p52, %s53, %s54
      %p58 = pneg %p52
      %p59 = scmp.eq.s32.totalorder %s17, 1
      %p60 = por %p58, %p59
      %p61 = scmp.ne.s32.totalorder %s53, %s56
      %p62 = scmp.eq.s32.totalorder %s17, 0
      %p63 = por %p61, %p62
      %p64 = scmp.ne.s32.totalorder %s53, %s56
      %p65 = scmp.eq.s32.totalorder %s22, 1
      %p66 = por %p64, %p65
      %p67 = scmp.ne.s32.totalorder %s56, %s57
      %p68 = scmp.eq.s32.totalorder %s22, 0
      %p69 = por %p67, %p68
      %p70 = scmp.ne.s32.totalorder %s56, %s57
      %p71 = scmp.eq.s32.totalorder %s23, 1
      %p72 = por %p70, %p71
      %p74 = scmp.ne.s32.totalorder %s57, %s73
      %p75 = scmp.eq.s32.totalorder %s23, 0
      %p76 = por %p74, %p75
      %s78 = sadd.s32 %s77, 1
      %p81 = scmp.eq.s32.totalorder %s17, 1
      %p82 = scmp.ne.s32.totalorder %s77, %s79
      %p83 = scmp.eq.s32.totalorder %s17, 0
      %p84 = por %p82, %p83
      %p85 = scmp.ne.s32.totalorder %s77, %s79
      %p86 = scmp.eq.s32.totalorder %s22, 1
      %p87 = por %p85, %p86
      %p88 = scmp.ne.s32.totalorder %s79, %s80
      %p89 = scmp.eq.s32.totalorder %s22, 0
      %p90 = por %p88, %p89
      %p91 = scmp.ne.s32.totalorder %s79, %s80
      %p92 = scmp.eq.s32.totalorder %s23, 1
      %p93 = por %p91, %p92
      %p95 = scmp.ne.s32.totalorder %s80, %s94
      %p96 = scmp.eq.s32.totalorder %s23, 0
      %p97 = por %p95, %p96
      %s98 = ssub.s32 %s17, %s24
      %p99 = scmp.eq.s32.totalorder %s98, 0
      %s101 = sadd.s32 %s100, 1
      %s102 = scalar_select %p99, %s100, %s101
      %p105 = pneg %p99
      %p106 = scmp.eq.s32.totalorder %s17, 1
      %p107 = por %p105, %p106
      %p108 = scmp.ne.s32.totalorder %s100, %s103
      %p109 = scmp.eq.s32.totalorder %s17, 0
      %p110 = por %p108, %p109
      %p111 = scmp.ne.s32.totalorder %s100, %s103
      %p112 = scmp.eq.s32.totalorder %s22, 1
      %p113 = por %p111, %p112
      %p114 = scmp.ne.s32.totalorder %s103, %s104
      %p115 = scmp.eq.s32.totalorder %s22, 0
      %p116 = por %p114, %p115
      %p117 = scmp.ne.s32.totalorder %s103, %s104
      %p118 = scmp.eq.s32.totalorder %s23, 1
      %p119 = por %p117, %p118
      %p121 = scmp.ne.s32.totalorder %s104, %s120
      %p122 = scmp.eq.s32.totalorder %s23, 0
      %p123 = por %p121, %p122
      %s124 = ssub.s32 %s17, %s24
      %p125 = scmp.eq.s32.totalorder %s124, 0
      %s127 = sadd.s32 %s126, 1
      %s128 = scalar_select %p125, %s126, %s127
      %p131 = pneg %p125
      %p132 = scmp.eq.s32.totalorder %s17, 1
      %p133 = por %p131, %p132
      %p134 = scmp.ne.s32.totalorder %s126, %s129
      %p135 = scmp.eq.s32.totalorder %s17, 0
      %p136 = por %p134, %p135
      %p137 = scmp.ne.s32.totalorder %s126, %s129
      %p138 = scmp.eq.s32.totalorder %s22, 1
      %p139 = por %p137, %p138
      %p140 = scmp.ne.s32.totalorder %s129, %s130
      %p141 = scmp.eq.s32.totalorder %s22, 0
      %p142 = por %p140, %p141
      %p143 = scmp.ne.s32.totalorder %s129, %s130
      %p144 = scmp.eq.s32.totalorder %s23, 1
      %p145 = por %p143, %p144
      %p147 = scmp.ne.s32.totalorder %s130, %s146
      %p148 = scmp.eq.s32.totalorder %s23, 0
      %p149 = por %p147, %p148
      %p150 = scmp.le.s32.totalorder 1, %s17
      %p151 = scmp.lt.s32.totalorder %s17, 3
      %p152 = pnand %p150, %p151
      %p153 = pneg %p152
      // Predicated region
      $region9: #{tpu_custom_call.1} parent=5 // pred_check
        _
      $region10: #{tpu_custom_call.1} parent=5 // pred_check_branch
        %155 = sbr.rel (%p152) target = $region12
      $region11: #{tpu_custom_call.1} parent=5 // pred_region
        %s156 = ssub.s32 %s17, 1
        // Predicated region
        $region13: #{tpu_custom_call.1} parent=11 // pred_check
          %p157 = pneg %p90
        $region14: #{tpu_custom_call.1} parent=11 // pred_check_branch
          %159 = sbr.rel (%p157) target = $region16
        $region15: #{tpu_custom_call.1} parent=11 // pred_region
          _
        $region16: #{tpu_custom_call.1} parent=11 // pred_fallthru
          _
      $region12: #{tpu_custom_call.1} parent=5 // pred_fallthru
        _
      %p160 = scmp.lt.s32.totalorder %s17, 2
      // Predicated region
      $region17: #{tpu_custom_call.1} parent=5 // pred_check
        %p161 = pneg %p160
      $region18: #{tpu_custom_call.1} parent=5 // pred_check_branch
        %163 = sbr.rel (%p161) target = $region20
      $region19: #{tpu_custom_call.1} parent=5 // pred_region
        // Predicated region
        $region21: #{tpu_custom_call.1} parent=19 // pred_check
          %p164 = pneg %p37
        $region22: #{tpu_custom_call.1} parent=19 // pred_check_branch
          %166 = sbr.rel (%p164) target = $region24
        $region23: #{tpu_custom_call.1} parent=19 // pred_region
          %s167 = sand.u32 %s27, 1
          %s168 = scalar_lea.sflag [#allocation3], %s167
          %s169 = sand.u32 %s27, 1
          %s170 = smul.addr %s169, 256
          %s171 = scalar_lea.vmem [#allocation2], %s170
          %s172 = smul.u32 16, %s17
          %174 = vsyncadd %s168, 0
          %s175 = smul.addr %s172, 2
          %s176 = smul.addr %s175, 8
          %s177 = scalar_lea.hbm %s0, %s176
          %s178 = sshll.u32 %s177, 4
          %s179 = int_to_ptr.hbm [resolvable:$true] %s178
          %s180 = sshll.u32 %s171, 4
          %s181 = int_to_ptr.vmem [resolvable:$true] %s180
          %186 = dma.hbm_to_vmem [thread:$0]  %s179, 4096, %s181, %s168, 256, 256, 16
        $region24: #{tpu_custom_call.1} parent=19 // pred_fallthru
          _
        // Predicated region
        $region25: #{tpu_custom_call.1} parent=19 // pred_check
          %p187 = pneg %p63
        $region26: #{tpu_custom_call.1} parent=19 // pred_check_branch
          %189 = sbr.rel (%p187) target = $region28
        $region27: #{tpu_custom_call.1} parent=19 // pred_region
          %s190 = smul.u32 16, %s17
          %p191 = scmp.lt.s32.totalorder %s190, 31
          %s192 = scalar_select %p191, %s190, 31
          %s193 = smul.addr %s192, 8
          %s194 = scalar_lea.vmem %s1, %s193
          %s195 = smul.u32 16, %s17
        $region28: #{tpu_custom_call.1} parent=19 // pred_fallthru
          _
      $region20: #{tpu_custom_call.1} parent=5 // pred_fallthru
        _
      %p196 = scmp.le.s32.totalorder 1, %s17
      %p197 = scmp.lt.s32.totalorder %s17, 3
      %p198 = pnand %p196, %p197
      %p199 = pneg %p198
      // Predicated region
      $region29: #{tpu_custom_call.1} parent=5 // pred_check
        _
      $region30: #{tpu_custom_call.1} parent=5 // pred_check_branch
        %201 = sbr.rel (%p198) target = $region32
      $region31: #{tpu_custom_call.1} parent=5 // pred_region
        %s202 = ssub.s32 %s17, 1
        %s203 = sand.u32 %s30, 1
        %s204 = scalar_lea.sflag [#allocation3], %s203
        %s205 = sand.u32 %s30, 1
        %s206 = smul.addr %s205, 256
        %s207 = scalar_lea.vmem [#allocation2], %s206
        // Predicated region
        $region33: #{tpu_custom_call.1} parent=31 // pred_check
          %p208 = pneg %p43
        $region34: #{tpu_custom_call.1} parent=31 // pred_check_branch
          %210 = sbr.rel (%p208) target = $region36
        $region35: #{tpu_custom_call.1} parent=31 // pred_region
          %212 = dma.done %s204, 4096
        $region36: #{tpu_custom_call.1} parent=31 // pred_fallthru
          _
        %s213 = sand.u32 %s30, 1
        %s214 = scalar_lea.sflag [#allocation3], %s213
        %s215 = sand.u32 %s30, 1
        %s216 = smul.addr %s215, 256
        %s217 = scalar_lea.vmem [#allocation2], %s216
        %p218 = pneg %p43
        %p219 = pneg %p40
        %s220 = smul.u32 16, %s22
        %p221 = scmp.lt.s32.totalorder %s220, 31
        %s222 = scalar_select %p221, %s220, 31
        %s223 = smul.addr %s222, 8
        %s224 = scalar_lea.vmem %s1, %s223
        %p225 = pneg %p69
        %p226 = pneg %p66
        %p227 = pneg %p90
        %p228 = pneg %p87
        %p229 = pneg %p116
        %p230 = pneg %p113
        %s231 = smul.u32 16, %s22
        %p232 = scmp.lt.s32.totalorder %s231, 31
        %s233 = scalar_select %p232, %s231, 31
        %s234 = smul.addr %s233, 8
        %s235 = scalar_lea.vmem %s3, %s234
        %p236 = pneg %p142
        %p237 = pneg %p139
        %s238 = sand.u32 %s129, 1
        %s239 = scalar_lea.sflag [#allocation4], %s238
        %s240 = sand.u32 %s129, 1
        %s241 = smul.addr %s240, 64
        %s242 = scalar_lea.vmem [#allocation5], %s241
        %s243 = smul.u32 16, %s22
        %s244 = smul.u32 16, %s22
        %p245 = scmp.lt.s32.totalorder %s244, 31
        %s246 = scalar_select %p245, %s244, 31
        %s247 = smul.addr %s246, 8
        %s248 = scalar_lea.vmem %s1, %s247
        %s249 = smul.u32 16, %s22
        %s250 = smul.u32 16, %s22
        %p251 = scmp.lt.s32.totalorder %s250, 31
        %s252 = scalar_select %p251, %s250, 31
        %s253 = smul.addr %s252, 8
        %s254 = scalar_lea.vmem %s3, %s253
        %s255 = smul.u32 16, %s22
        %s256 = smul.u32 16, %s22
        %v258 = vld [vmem:[%s207] sm:$0xff]
        %v259 = vld [vmem:[%s207 + $0x8] sm:$0xff]
        %v260 = vld [vmem:[%s207 + $0x10] sm:$0xff]
        %v261 = vld [vmem:[%s207 + $0x18] sm:$0xff]
        %v262 = vld [vmem:[%s207 + $0x20] sm:$0xff]
        %v263 = vld [vmem:[%s207 + $0x28] sm:$0xff]
        %v264 = vld [vmem:[%s207 + $0x30] sm:$0xff]
        %v265 = vld [vmem:[%s207 + $0x38] sm:$0xff]
        %v266 = vld [vmem:[%s207 + $0x40] sm:$0xff]
        %v267 = vld [vmem:[%s207 + $0x48] sm:$0xff]
        %v268 = vld [vmem:[%s207 + $0x50] sm:$0xff]
        %v269 = vld [vmem:[%s207 + $0x58] sm:$0xff]
        %v270 = vld [vmem:[%s207 + $0x60] sm:$0xff]
        %v271 = vld [vmem:[%s207 + $0x68] sm:$0xff]
        %v272 = vld [vmem:[%s207 + $0x70] sm:$0xff]
        %v273 = vld [vmem:[%s207 + $0x78] sm:$0xff]
        %v274 = vld [vmem:[%s207 + $0x80] sm:$0xff]
        %v275 = vld [vmem:[%s207 + $0x88] sm:$0xff]
        %v276 = vld [vmem:[%s207 + $0x90] sm:$0xff]
        %v277 = vld [vmem:[%s207 + $0x98] sm:$0xff]
        %v278 = vld [vmem:[%s207 + $0xa0] sm:$0xff]
        %v279 = vld [vmem:[%s207 + $0xa8] sm:$0xff]
        %v280 = vld [vmem:[%s207 + $0xb0] sm:$0xff]
        %v281 = vld [vmem:[%s207 + $0xb8] sm:$0xff]
        %v282 = vld [vmem:[%s207 + $0xc0] sm:$0xff]
        %v283 = vld [vmem:[%s207 + $0xc8] sm:$0xff]
        %v284 = vld [vmem:[%s207 + $0xd0] sm:$0xff]
        %v285 = vld [vmem:[%s207 + $0xd8] sm:$0xff]
        %v286 = vld [vmem:[%s207 + $0xe0] sm:$0xff]
        %v287 = vld [vmem:[%s207 + $0xe8] sm:$0xff]
        %v288 = vld [vmem:[%s207 + $0xf0] sm:$0xff]
        %v289 = vld [vmem:[%s207 + $0xf8] sm:$0xff]
        %v290 = vadd.f32 %v258, %v259
        %291 = vadd.xlane.f32.xlu0 %v290
        %v292 = vpop.xlane.xlu0 %291
        %v293 = vadd.f32 %v260, %v261
        %294 = vadd.xlane.f32.xlu0 %v293
        %v295 = vpop.xlane.xlu0 %294
        %v296 = vadd.f32 %v262, %v263
        %297 = vadd.xlane.f32.xlu0 %v296
        %v298 = vpop.xlane.xlu0 %297
        %v299 = vadd.f32 %v264, %v265
        %300 = vadd.xlane.f32.xlu0 %v299
        %v301 = vpop.xlane.xlu0 %300
        %v302 = vadd.f32 %v266, %v267
        %303 = vadd.xlane.f32.xlu0 %v302
        %v304 = vpop.xlane.xlu0 %303
        %v305 = vadd.f32 %v268, %v269
        %306 = vadd.xlane.f32.xlu0 %v305
        %v307 = vpop.xlane.xlu0 %306
        %v308 = vadd.f32 %v270, %v271
        %309 = vadd.xlane.f32.xlu0 %v308
        %v310 = vpop.xlane.xlu0 %309
        %v311 = vadd.f32 %v272, %v273
        %312 = vadd.xlane.f32.xlu0 %v311
        %v313 = vpop.xlane.xlu0 %312
        %v314 = vadd.f32 %v274, %v275
        %315 = vadd.xlane.f32.xlu0 %v314
        %v316 = vpop.xlane.xlu0 %315
        %v317 = vadd.f32 %v276, %v277
        %318 = vadd.xlane.f32.xlu0 %v317
        %v319 = vpop.xlane.xlu0 %318
        %v320 = vadd.f32 %v278, %v279
        %321 = vadd.xlane.f32.xlu0 %v320
        %v322 = vpop.xlane.xlu0 %321
        %v323 = vadd.f32 %v280, %v281
        %324 = vadd.xlane.f32.xlu0 %v323
        %v325 = vpop.xlane.xlu0 %324
        %v326 = vadd.f32 %v282, %v283
        %327 = vadd.xlane.f32.xlu0 %v326
        %v328 = vpop.xlane.xlu0 %327
        %v329 = vadd.f32 %v284, %v285
        %330 = vadd.xlane.f32.xlu0 %v329
        %v331 = vpop.xlane.xlu0 %330
        %v332 = vadd.f32 %v286, %v287
        %333 = vadd.xlane.f32.xlu0 %v332
        %v334 = vpop.xlane.xlu0 %333
        %v335 = vadd.f32 %v288, %v289
        %336 = vadd.xlane.f32.xlu0 %v335
        %v337 = vpop.xlane.xlu0 %336
        %v338 = vadd.f32 %v292, 1.0
        %v339 = vadd.f32 %v295, 1.0
        %v340 = vadd.f32 %v298, 1.0
        %v341 = vadd.f32 %v301, 1.0
        %v342 = vadd.f32 %v304, 1.0
        %v343 = vadd.f32 %v307, 1.0
        %v344 = vadd.f32 %v310, 1.0
        %v345 = vadd.f32 %v313, 1.0
        %v346 = vadd.f32 %v316, 1.0
        %v347 = vadd.f32 %v319, 1.0
        %v348 = vadd.f32 %v322, 1.0
        %v349 = vadd.f32 %v325, 1.0
        %v350 = vadd.f32 %v328, 1.0
        %v351 = vadd.f32 %v331, 1.0
        %v352 = vadd.f32 %v334, 1.0
        %v353 = vadd.f32 %v337, 1.0
        %v354 = vrsqrt.pop %v338
        %v355 = vmul.f32 %v354, %v338
        %v356 = vmul.f32 %v355, %v354
        %v357 = vmul.f32 0.5, %v356
        %v358 = vsub.f32 1.5, %v357
        %v359 = vmul.f32 %v354, %v358
        %vm360 = vweird.f32 %v338
        %vm361 = vweird.f32 %v354
        %vm362 = vmor %vm360, %vm361
        %v363 = vsel %vm362, %v354, %v359
        %v364 = vrsqrt.pop %v339
        %v365 = vmul.f32 %v364, %v339
        %v366 = vmul.f32 %v365, %v364
        %v367 = vmul.f32 0.5, %v366
        %v368 = vsub.f32 1.5, %v367
        %v369 = vmul.f32 %v364, %v368
        %vm370 = vweird.f32 %v339
        %vm371 = vweird.f32 %v364
        %vm372 = vmor %vm370, %vm371
        %v373 = vsel %vm372, %v364, %v369
        %v374 = vrsqrt.pop %v340
        %v375 = vmul.f32 %v374, %v340
        %v376 = vmul.f32 %v375, %v374
        %v377 = vmul.f32 0.5, %v376
        %v378 = vsub.f32 1.5, %v377
        %v379 = vmul.f32 %v374, %v378
        %vm380 = vweird.f32 %v340
        %vm381 = vweird.f32 %v374
        %vm382 = vmor %vm380, %vm381
        %v383 = vsel %vm382, %v374, %v379
        %v384 = vrsqrt.pop %v341
        %v385 = vmul.f32 %v384, %v341
        %v386 = vmul.f32 %v385, %v384
        %v387 = vmul.f32 0.5, %v386
        %v388 = vsub.f32 1.5, %v387
        %v389 = vmul.f32 %v384, %v388
        %vm390 = vweird.f32 %v341
        %vm391 = vweird.f32 %v384
        %vm392 = vmor %vm390, %vm391
        %v393 = vsel %vm392, %v384, %v389
        %v394 = vrsqrt.pop %v342
        %v395 = vmul.f32 %v394, %v342
        %v396 = vmul.f32 %v395, %v394
        %v397 = vmul.f32 0.5, %v396
        %v398 = vsub.f32 1.5, %v397
        %v399 = vmul.f32 %v394, %v398
        %vm400 = vweird.f32 %v342
        %vm401 = vweird.f32 %v394
        %vm402 = vmor %vm400, %vm401
        %v403 = vsel %vm402, %v394, %v399
        %v404 = vrsqrt.pop %v343
        %v405 = vmul.f32 %v404, %v343
        %v406 = vmul.f32 %v405, %v404
        %v407 = vmul.f32 0.5, %v406
        %v408 = vsub.f32 1.5, %v407
        %v409 = vmul.f32 %v404, %v408
        %vm410 = vweird.f32 %v343
        %vm411 = vweird.f32 %v404
        %vm412 = vmor %vm410, %vm411
        %v413 = vsel %vm412, %v404, %v409
        %v414 = vrsqrt.pop %v344
        %v415 = vmul.f32 %v414, %v344
        %v416 = vmul.f32 %v415, %v414
        %v417 = vmul.f32 0.5, %v416
        %v418 = vsub.f32 1.5, %v417
        %v419 = vmul.f32 %v414, %v418
        %vm420 = vweird.f32 %v344
        %vm421 = vweird.f32 %v414
        %vm422 = vmor %vm420, %vm421
        %v423 = vsel %vm422, %v414, %v419
        %v424 = vrsqrt.pop %v345
        %v425 = vmul.f32 %v424, %v345
        %v426 = vmul.f32 %v425, %v424
        %v427 = vmul.f32 0.5, %v426
        %v428 = vsub.f32 1.5, %v427
        %v429 = vmul.f32 %v424, %v428
        %vm430 = vweird.f32 %v345
        %vm431 = vweird.f32 %v424
        %vm432 = vmor %vm430, %vm431
        %v433 = vsel %vm432, %v424, %v429
        %v434 = vrsqrt.pop %v346
        %v435 = vmul.f32 %v434, %v346
        %v436 = vmul.f32 %v435, %v434
        %v437 = vmul.f32 0.5, %v436
        %v438 = vsub.f32 1.5, %v437
        %v439 = vmul.f32 %v434, %v438
        %vm440 = vweird.f32 %v346
        %vm441 = vweird.f32 %v434
        %vm442 = vmor %vm440, %vm441
        %v443 = vsel %vm442, %v434, %v439
        %v444 = vrsqrt.pop %v347
        %v445 = vmul.f32 %v444, %v347
        %v446 = vmul.f32 %v445, %v444
        %v447 = vmul.f32 0.5, %v446
        %v448 = vsub.f32 1.5, %v447
        %v449 = vmul.f32 %v444, %v448
        %vm450 = vweird.f32 %v347
        %vm451 = vweird.f32 %v444
        %vm452 = vmor %vm450, %vm451
        %v453 = vsel %vm452, %v444, %v449
        %v454 = vrsqrt.pop %v348
        %v455 = vmul.f32 %v454, %v348
        %v456 = vmul.f32 %v455, %v454
        %v457 = vmul.f32 0.5, %v456
        %v458 = vsub.f32 1.5, %v457
        %v459 = vmul.f32 %v454, %v458
        %vm460 = vweird.f32 %v348
        %vm461 = vweird.f32 %v454
        %vm462 = vmor %vm460, %vm461
        %v463 = vsel %vm462, %v454, %v459
        %v464 = vrsqrt.pop %v349
        %v465 = vmul.f32 %v464, %v349
        %v466 = vmul.f32 %v465, %v464
        %v467 = vmul.f32 0.5, %v466
        %v468 = vsub.f32 1.5, %v467
        %v469 = vmul.f32 %v464, %v468
        %vm470 = vweird.f32 %v349
        %vm471 = vweird.f32 %v464
        %vm472 = vmor %vm470, %vm471
        %v473 = vsel %vm472, %v464, %v469
        %v474 = vrsqrt.pop %v350
        %v475 = vmul.f32 %v474, %v350
        %v476 = vmul.f32 %v475, %v474
        %v477 = vmul.f32 0.5, %v476
        %v478 = vsub.f32 1.5, %v477
        %v479 = vmul.f32 %v474, %v478
        %vm480 = vweird.f32 %v350
        %vm481 = vweird.f32 %v474
        %vm482 = vmor %vm480, %vm481
        %v483 = vsel %vm482, %v474, %v479
        %v484 = vrsqrt.pop %v351
        %v485 = vmul.f32 %v484, %v351
        %v486 = vmul.f32 %v485, %v484
        %v487 = vmul.f32 0.5, %v486
        %v488 = vsub.f32 1.5, %v487
        %v489 = vmul.f32 %v484, %v488
        %vm490 = vweird.f32 %v351
        %vm491 = vweird.f32 %v484
        %vm492 = vmor %vm490, %vm491
        %v493 = vsel %vm492, %v484, %v489
        %v494 = vrsqrt.pop %v352
        %v495 = vmul.f32 %v494, %v352
        %v496 = vmul.f32 %v495, %v494
        %v497 = vmul.f32 0.5, %v496
        %v498 = vsub.f32 1.5, %v497
        %v499 = vmul.f32 %v494, %v498
        %vm500 = vweird.f32 %v352
        %vm501 = vweird.f32 %v494
        %vm502 = vmor %vm500, %vm501
        %v503 = vsel %vm502, %v494, %v499
        %v504 = vrsqrt.pop %v353
        %v505 = vmul.f32 %v504, %v353
        %v506 = vmul.f32 %v505, %v504
        %v507 = vmul.f32 0.5, %v506
        %v508 = vsub.f32 1.5, %v507
        %v509 = vmul.f32 %v504, %v508
        %vm510 = vweird.f32 %v353
        %vm511 = vweird.f32 %v504
        %vm512 = vmor %vm510, %vm511
        %v513 = vsel %vm512, %v504, %v509
        %vm514 = vcmask 7168
        %515 = vst.msk [vmem:[%s254] sm:$0xff] %vm514, %v363
        %516 = vst.msk [vmem:[%s254 + $0x8] sm:$0xff] %vm514, %v373
        %517 = vst.msk [vmem:[%s254 + $0x10] sm:$0xff] %vm514, %v383
        %518 = vst.msk [vmem:[%s254 + $0x18] sm:$0xff] %vm514, %v393
        %519 = vst.msk [vmem:[%s254 + $0x20] sm:$0xff] %vm514, %v403
        %520 = vst.msk [vmem:[%s254 + $0x28] sm:$0xff] %vm514, %v413
        %521 = vst.msk [vmem:[%s254 + $0x30] sm:$0xff] %vm514, %v423
        %522 = vst.msk [vmem:[%s254 + $0x38] sm:$0xff] %vm514, %v433
        %523 = vst.msk [vmem:[%s254 + $0x40] sm:$0xff] %vm514, %v443
        %524 = vst.msk [vmem:[%s254 + $0x48] sm:$0xff] %vm514, %v453
        %525 = vst.msk [vmem:[%s254 + $0x50] sm:$0xff] %vm514, %v463
        %526 = vst.msk [vmem:[%s254 + $0x58] sm:$0xff] %vm514, %v473
        %527 = vst.msk [vmem:[%s254 + $0x60] sm:$0xff] %vm514, %v483
        %528 = vst.msk [vmem:[%s254 + $0x68] sm:$0xff] %vm514, %v493
        %529 = vst.msk [vmem:[%s254 + $0x70] sm:$0xff] %vm514, %v503
        %530 = vst.msk [vmem:[%s254 + $0x78] sm:$0xff] %vm514, %v513
        %v531 = vld [vmem:[%s248] sm:$0xff]
        %v532 = vld [vmem:[%s248 + $0x8] sm:$0xff]
        %v533 = vld [vmem:[%s248 + $0x10] sm:$0xff]
        %v534 = vld [vmem:[%s248 + $0x18] sm:$0xff]
        %v535 = vld [vmem:[%s248 + $0x20] sm:$0xff]
        %v536 = vld [vmem:[%s248 + $0x28] sm:$0xff]
        %v537 = vld [vmem:[%s248 + $0x30] sm:$0xff]
        %v538 = vld [vmem:[%s248 + $0x38] sm:$0xff]
        %v539 = vld [vmem:[%s248 + $0x40] sm:$0xff]
        %v540 = vld [vmem:[%s248 + $0x48] sm:$0xff]
        %v541 = vld [vmem:[%s248 + $0x50] sm:$0xff]
        %v542 = vld [vmem:[%s248 + $0x58] sm:$0xff]
        %v543 = vld [vmem:[%s248 + $0x60] sm:$0xff]
        %v544 = vld [vmem:[%s248 + $0x68] sm:$0xff]
        %v545 = vld [vmem:[%s248 + $0x70] sm:$0xff]
        %v546 = vld [vmem:[%s248 + $0x78] sm:$0xff]
        %v547 = vpack.c.bf16 %v532, %v531
        %v548 = vpack.c.bf16 %v534, %v533
        %v549 = vpack.c.bf16 %v536, %v535
        %v550 = vpack.c.bf16 %v538, %v537
        %v551 = vpack.c.bf16 %v540, %v539
        %v552 = vpack.c.bf16 %v542, %v541
        %v553 = vpack.c.bf16 %v544, %v543
        %v554 = vpack.c.bf16 %v546, %v545
        %v555 = vld [vmem:[%s2] sm:$0xf]
        %v556 = vld [vmem:[%s2 + $0x4] sm:$0xf]
        %v557 = vld [vmem:[%s2 + $0x8] sm:$0xf]
        %v558 = vld [vmem:[%s2 + $0xc] sm:$0xf]
        %v563 = vunpack.c.l.b16 %v555
        %v564 = vunpack.c.l.b16 %v556
        %v565 = vunpack.c.l.b16 %v557
        %v566 = vunpack.c.l.b16 %v558
        %v567 = vpack.c.b16 %v564, %v563
        %v568 = vpack.c.b16 %v566, %v565
        %vm571 = vcmask 261120
        %v573 = vsel %vm571, %v547, 0
        %v576 = vsel %vm571, %v548, 0
        %v579 = vsel %vm571, %v549, 0
        %v582 = vsel %vm571, %v550, 0
        %v585 = vsel %vm571, %v551, 0
        %v588 = vsel %vm571, %v552, 0
        %v591 = vsel %vm571, %v553, 0
        %v594 = vsel %vm571, %v554, 0
        %596 = vmatpush.bf16.msra.mxu0 0
        %597 = vmatpush.bf16.msra.mxu0 0
        %598 = vmatpush.bf16.msra.mxu0 0
        %599 = vmatpush.bf16.msra.mxu0 0
        %600 = vmatpush.bf16.msra.mxu0 0
        %601 = vmatpush.bf16.msra.mxu0 0
        %602 = vmatpush.bf16.msra.mxu0 %v568
        %603 = vmatpush.bf16.msra.mxu0 %v567
        %604 = vmatmul.bf16.gmra.mxu0 %v573
        %v605 = vpop.f32.mrf.mxu0
        %v606 = vadd.f32 0.0, %v605
        %v607 = vpop.f32.mrf.mxu0
        %v608 = vadd.f32 0.0, %v607
        %609 = vmatmul.bf16.gmra.mxu0 %v576
        %v610 = vpop.f32.mrf.mxu0
        %v611 = vadd.f32 0.0, %v610
        %v612 = vpop.f32.mrf.mxu0
        %v613 = vadd.f32 0.0, %v612
        %614 = vmatmul.bf16.gmra.mxu0 %v579
        %v615 = vpop.f32.mrf.mxu0
        %v616 = vadd.f32 0.0, %v615
        %v617 = vpop.f32.mrf.mxu0
        %v618 = vadd.f32 0.0, %v617
        %619 = vmatmul.bf16.gmra.mxu0 %v582
        %v620 = vpop.f32.mrf.mxu0
        %v621 = vadd.f32 0.0, %v620
        %v622 = vpop.f32.mrf.mxu0
        %v623 = vadd.f32 0.0, %v622
        %624 = vmatmul.bf16.gmra.mxu0 %v585
        %v625 = vpop.f32.mrf.mxu0
        %v626 = vadd.f32 0.0, %v625
        %v627 = vpop.f32.mrf.mxu0
        %v628 = vadd.f32 0.0, %v627
        %629 = vmatmul.bf16.gmra.mxu0 %v588
        %v630 = vpop.f32.mrf.mxu0
        %v631 = vadd.f32 0.0, %v630
        %v632 = vpop.f32.mrf.mxu0
        %v633 = vadd.f32 0.0, %v632
        %634 = vmatmul.bf16.gmra.mxu0 %v591
        %v635 = vpop.f32.mrf.mxu0
        %v636 = vadd.f32 0.0, %v635
        %v637 = vpop.f32.mrf.mxu0
        %v638 = vadd.f32 0.0, %v637
        %639 = vmatmul.bf16.gmra.mxu0 %v594
        %v640 = vpop.f32.mrf.mxu0
        %v641 = vadd.f32 0.0, %v640
        %v642 = vpop.f32.mrf.mxu0
        %v643 = vadd.f32 0.0, %v642
        %644 = vdwg.mxu0
        %v645 = vmul.f32 %v363, %v606
        %v646 = vmul.f32 %v373, %v608
        %v647 = vmul.f32 %v383, %v611
        %v648 = vmul.f32 %v393, %v613
        %v649 = vmul.f32 %v403, %v616
        %v650 = vmul.f32 %v413, %v618
        %v651 = vmul.f32 %v423, %v621
        %v652 = vmul.f32 %v433, %v623
        %v653 = vmul.f32 %v443, %v626
        %v654 = vmul.f32 %v453, %v628
        %v655 = vmul.f32 %v463, %v631
        %v656 = vmul.f32 %v473, %v633
        %v657 = vmul.f32 %v483, %v636
        %v658 = vmul.f32 %v493, %v638
        %v659 = vmul.f32 %v503, %v641
        %v660 = vmul.f32 %v513, %v643
        %v661 = vpack.c.bf16 %v645, %v645
        %v662 = vpack.c.bf16 %v646, %v646
        %v663 = vpack.c.bf16 %v647, %v647
        %v664 = vpack.c.bf16 %v648, %v648
        %v665 = vpack.c.bf16 %v649, %v649
        %v666 = vpack.c.bf16 %v650, %v650
        %v667 = vpack.c.bf16 %v651, %v651
        %v668 = vpack.c.bf16 %v652, %v652
        %v669 = vpack.c.bf16 %v653, %v653
        %v670 = vpack.c.bf16 %v654, %v654
        %v671 = vpack.c.bf16 %v655, %v655
        %v672 = vpack.c.bf16 %v656, %v656
        %v673 = vpack.c.bf16 %v657, %v657
        %v674 = vpack.c.bf16 %v658, %v658
        %v675 = vpack.c.bf16 %v659, %v659
        %v676 = vpack.c.bf16 %v660, %v660
        %677 = vst [vmem:[%s242] sm:$0xf] %v661
        %678 = vst [vmem:[%s242 + $0x4] sm:$0xf] %v662
        %679 = vst [vmem:[%s242 + $0x8] sm:$0xf] %v663
        %680 = vst [vmem:[%s242 + $0xc] sm:$0xf] %v664
        %681 = vst [vmem:[%s242 + $0x10] sm:$0xf] %v665
        %682 = vst [vmem:[%s242 + $0x14] sm:$0xf] %v666
        %683 = vst [vmem:[%s242 + $0x18] sm:$0xf] %v667
        %684 = vst [vmem:[%s242 + $0x1c] sm:$0xf] %v668
        %685 = vst [vmem:[%s242 + $0x20] sm:$0xf] %v669
        %686 = vst [vmem:[%s242 + $0x24] sm:$0xf] %v670
        %687 = vst [vmem:[%s242 + $0x28] sm:$0xf] %v671
        %688 = vst [vmem:[%s242 + $0x2c] sm:$0xf] %v672
        %689 = vst [vmem:[%s242 + $0x30] sm:$0xf] %v673
        %690 = vst [vmem:[%s242 + $0x34] sm:$0xf] %v674
        %691 = vst [vmem:[%s242 + $0x38] sm:$0xf] %v675
        %692 = vst [vmem:[%s242 + $0x3c] sm:$0xf] %v676
        %s693 = smul.u32 16, %s22
        %p694 = scmp.lt.s32.totalorder %s693, 31
        %s695 = scalar_select %p694, %s693, 31
        %s696 = smul.addr %s695, 8
        %s697 = scalar_lea.vmem %s3, %s696
        %s698 = sand.u32 %s129, 1
        %s699 = scalar_lea.sflag [#allocation4], %s698
        %s700 = sand.u32 %s129, 1
        %s701 = smul.addr %s700, 64
        %s702 = scalar_lea.vmem [#allocation5], %s701
        // Predicated region
        $region37: #{tpu_custom_call.1} parent=31 // pred_check
          %p703 = pneg %p113
        $region38: #{tpu_custom_call.1} parent=31 // pred_check_branch
          %705 = sbr.rel (%p703) target = $region40
        $region39: #{tpu_custom_call.1} parent=31 // pred_region
          %s706 = smul.u32 16, %s22
        $region40: #{tpu_custom_call.1} parent=31 // pred_fallthru
          _
        // Predicated region
        $region41: #{tpu_custom_call.1} parent=31 // pred_check
          %p707 = pneg %p139
        $region42: #{tpu_custom_call.1} parent=31 // pred_check_branch
          %709 = sbr.rel (%p707) target = $region44
        $region43: #{tpu_custom_call.1} parent=31 // pred_region
          %s710 = smul.u32 16, %s22
          %712 = vsyncadd %s699, 0
          %s713 = smul.addr %s710, 4
          %s714 = scalar_lea.hbm %s4, %s713
          %s715 = sshll.u32 %s702, 4
          %s716 = int_to_ptr.vmem [resolvable:$true] %s715
          %s717 = sshll.u32 %s714, 4
          %s718 = int_to_ptr.hbm [resolvable:$true] %s717
          %723 = dma.vmem_to_hbm [thread:$0]  %s716, 1024, %s718, %s699, 64, 64, 4
        $region44: #{tpu_custom_call.1} parent=31 // pred_fallthru
          _
      $region32: #{tpu_custom_call.1} parent=5 // pred_fallthru
        _
      %p724 = scmp.le.s32.totalorder 2, %s17
      // Predicated region
      $region45: #{tpu_custom_call.1} parent=5 // pred_check
        %p725 = pneg %p724
      $region46: #{tpu_custom_call.1} parent=5 // pred_check_branch
        %727 = sbr.rel (%p725) target = $region48
      $region47: #{tpu_custom_call.1} parent=5 // pred_region
        %s728 = ssub.s32 %s17, 2
        // Predicated region
        $region49: #{tpu_custom_call.1} parent=47 // pred_check
          %p729 = pneg %p119
        $region50: #{tpu_custom_call.1} parent=47 // pred_check_branch
          %731 = sbr.rel (%p729) target = $region52
        $region51: #{tpu_custom_call.1} parent=47 // pred_region
          %s732 = smul.u32 16, %s23
          %p733 = scmp.lt.s32.totalorder %s732, 31
          %s734 = scalar_select %p733, %s732, 31
          %s735 = smul.addr %s734, 8
          %s736 = scalar_lea.vmem %s3, %s735
        $region52: #{tpu_custom_call.1} parent=47 // pred_fallthru
          _
        // Predicated region
        $region53: #{tpu_custom_call.1} parent=47 // pred_check
          %p737 = pneg %p145
        $region54: #{tpu_custom_call.1} parent=47 // pred_check_branch
          %739 = sbr.rel (%p737) target = $region56
        $region55: #{tpu_custom_call.1} parent=47 // pred_region
          %s740 = sand.u32 %s130, 1
          %s741 = scalar_lea.sflag [#allocation4], %s740
          %s742 = sand.u32 %s130, 1
          %s743 = smul.addr %s742, 64
          %s744 = scalar_lea.vmem [#allocation5], %s743
          %746 = dma.done %s741, 1024
        $region56: #{tpu_custom_call.1} parent=47 // pred_fallthru
          _
      $region48: #{tpu_custom_call.1} parent=5 // pred_fallthru
        _
    $region6: #{tpu_custom_call.1} parent=1 // loop_footer
      %s21 = sadd.s32 1, %s17
    $region7: #{tpu_custom_call.1} parent=1 // loop_footer_branch
      %16 = sbr.rel target = $region3
    $region8: #{tpu_custom_call.1} parent=1 // loop_exit
      _
    %747 = vsyncpa [#allocation3], 1
    %s748 = scalar_lea.sflag [#allocation3], 1
    %749 = vsyncpa %s748, 1
    %750 = vsyncpa [#allocation4], 1
    %s751 = scalar_lea.sflag [#allocation4], 1
    %752 = vsyncpa %s751, 1

</llo_original>
